<compile_context>
chip_gen: v5e
topology: v5e:2x2
jax: 0.10.0
libtpu: 0.0.40
codegen_flags: <defaults>
</compile_context>

<pallas_src>
import jax
import jax.numpy as jnp
from jax.experimental import pallas as pl
from jax.experimental.pallas import tpu as pltpu


def _add_pos_kernel(x_ref, pos_ref, o_ref):
    # x_ref: (TB, TM, LW) in x.dtype; pos_ref: (1, TM, LW) in out dtype.
    # Cast + broadcast-add on the VPU; mem-bound, lane-dense stores.
    o_ref[...] = x_ref[...].astype(o_ref.dtype) + pos_ref[...]


def resize_pos_embedding(pos_embedding, H, W):
    """Bilinear, half-pixel centers, no antialias == F.interpolate(align_corners=False).

    Pure preprocessing of a parameter — precompute and cache per (H, W) at model
    build time for the known stage resolutions rather than recomputing per forward.
    """
    _, C, Hp, Wp = pos_embedding.shape
    if (H, W) == (Hp, Wp):
        return pos_embedding
    return jax.image.resize(
        pos_embedding, (1, C, H, W), method="bilinear", antialias=False
    )


def _choose_lane_width(total, max_lanes=4096):
    # Largest k*128 (k >= 1, lw <= max_lanes) that evenly divides the flattened C*H*W.
    k_max = min(total // 128, max_lanes // 128)
    for k in range(k_max, 0, -1):
        lw = k * 128
        if total % lw == 0:
            return lw
    return None


def _sublane_multiple(*dtypes):
    # Rows per vreg for the narrowest participating dtype (f32: 8, bf16: 16, i8: 32).
    min_itemsize = min(jnp.dtype(d).itemsize for d in dtypes)
    return max(8, 32 // min_itemsize)


def positional_encoding_forward(
    x,
    pos_embedding,
    *,
    target_block_bytes=2 << 20,   # ~2 MiB x-tiles; clamped so pipelined VMEM <= ~28 MiB
    batch_block=8,                # max images per grid step (TB)
    min_bytes_for_pallas=1 << 20, # below this, or when x can fuse into its producer,
                                  # let XLA handle the broadcast add
):
    """x: (B, C, H, W); pos_embedding: (1, C, Hp, Wp). Returns x + pos (broadcast over B)."""
    B, C, H, W = x.shape
    _, Cp, Hp, Wp = pos_embedding.shape
    assert C == Cp, "channel mismatch"

    pos = resize_pos_embedding(pos_embedding, H, W)

    # Match torch type promotion (e.g. bf16 x + f32 param -> f32 output).
    out_dtype = jnp.promote_types(x.dtype, pos.dtype)
    pos = pos.astype(out_dtype)

    L = C * H * W
    x_itemsize = jnp.dtype(x.dtype).itemsize
    out_itemsize = jnp.dtype(out_dtype).itemsize
    lane_width = _choose_lane_width(L)

    total_bytes = B * L * (x_itemsize + out_itemsize) + L * out_itemsize
    if lane_width is None or total_bytes < min_bytes_for_pallas:
        # Awkward (non-128-multiple) or tiny shapes: let XLA fuse the broadcast add.
        return x.astype(out_dtype) + pos

    nrows = L // lane_width
    sub = _sublane_multiple(x.dtype, out_dtype)

    # --- choose batch block (TB) and row block (TM) ------------------------------
    tb = min(B, batch_block)

    def _round_rows(t):
        if t >= nrows:
            return nrows                   # full dim -> always a legal block dim
        return max(sub, (t // sub) * sub)

    tm = _round_rows(max(1, target_block_bytes // (tb * lane_width * x_itemsize)))

    # VMEM budget: 2x-buffered (x tile + out tile + pos tile) <= ~28 MiB.
    def _pipelined_bytes(tb_, tm_):
        x_t = tb_ * tm_ * lane_width * x_itemsize
        o_t = tb_ * tm_ * lane_width * out_itemsize
        p_t = tm_ * lane_width * out_itemsize
        return 2 * (x_t + o_t + p_t)

    vmem_budget = 28 << 20
    while _pipelined_bytes(tb, tm) > vmem_budget and tm > sub:
        tm = _round_rows(tm // 2)
    while _pipelined_bytes(tb, tm) > vmem_budget and tb > 1:
        tb = max(1, tb // 2)

    grid_l = pl.cdiv(nrows, tm)
    grid_b = pl.cdiv(B, tb)

    # v7x megacore: make sure both TensorCores get work (>= 2 grid steps) when possible.
    if grid_l * grid_b < 2:
        if B > 1:
            tb = -(-B // 2)
            grid_b = pl.cdiv(B, tb)
        elif nrows > sub:
            tm = _round_rows(-(-nrows // 2))
            grid_l = pl.cdiv(nrows, tm)

    x_flat = x.reshape(B, nrows, lane_width)
    pos_flat = pos.reshape(1, nrows, lane_width)

    # Flattened axis outer, batch inner -> pos block index is constant across
    # consecutive steps, so its DMA is not re-issued per batch block.
    grid = (grid_l, grid_b)

    extra_kwargs = {}
    if out_dtype == x.dtype:
        # In-place add on x's HBM buffer (no second B*C*H*W allocation when x is a
        # dead intermediate in a larger jitted graph).
        extra_kwargs["input_output_aliases"] = {0: 0}

    out_flat = pl.pallas_call(
        _add_pos_kernel,
        out_shape=jax.ShapeDtypeStruct((B, nrows, lane_width), out_dtype),
        grid_spec=pltpu.PrefetchScalarGridSpec(
            num_scalar_prefetch=0,
            grid=grid,
            in_specs=[
                pl.BlockSpec((tb, tm, lane_width), lambda l, b: (b, l, 0)),
                pl.BlockSpec((1, tm, lane_width), lambda l, b: (0, l, 0)),
            ],
            out_specs=pl.BlockSpec((tb, tm, lane_width), lambda l, b: (b, l, 0)),
        ),
        compiler_params=pltpu.CompilerParams(
            dimension_semantics=("parallel", "parallel"),
            vmem_limit_bytes=32 * 1024 * 1024,
        ),
        **extra_kwargs,
    )(x_flat, pos_flat)
    return out_flat.reshape(B, C, H, W)


if __name__ == "__main__":
    key = jax.random.PRNGKey(0)
    k_x, k_pos = jax.random.split(key)

    # Small shapes consistent with the module: embed_dim=C, height=H, width=W.
    B, C, H, W = 2, 4, 16, 16

    # Deterministic parameter "init": trunc-normal std=0.02 (trunc_normal_ intent),
    # so the broadcast add is non-trivial.
    pos_embedding = 0.02 * jax.random.truncated_normal(
        k_pos, -2.0, 2.0, (1, C, H, W), dtype=jnp.float32
    )
    x = jax.random.normal(k_x, (B, C, H, W), dtype=jnp.float32)

    # 1) Same-(H, W) path (force the Pallas path despite the tiny demo size).
    ref = x + pos_embedding
    out = jax.block_until_ready(
        positional_encoding_forward(x, pos_embedding, min_bytes_for_pallas=0)
    )
    assert out.shape == (B, C, H, W)
    assert jnp.allclose(out, ref, atol=1e-6), "mismatch vs reference"

    # 2) Mismatched-(H, W) path: bilinear resize of the parameter, then the same kernel.
    x2 = jax.random.normal(k_x, (B, C, 8, 8), dtype=jnp.float32)
    ref2 = x2 + jax.image.resize(
        pos_embedding, (1, C, 8, 8), method="bilinear", antialias=False
    )
    out2 = jax.block_until_ready(
        positional_encoding_forward(x2, pos_embedding, min_bytes_for_pallas=0)
    )
    assert jnp.allclose(out2, ref2, atol=1e-5), "mismatch vs reference (resized)"

    # 3) Multi-tile path: several row tiles per step (with a partial edge row tile)
    #    and a partial batch block, forced via small block budgets so the test
    #    shape stays small.
    B3, C3, H3, W3 = 3, 16, 72, 128
    pos3 = 0.02 * jax.random.truncated_normal(
        k_pos, -2.0, 2.0, (1, C3, H3, W3), dtype=jnp.float32
    )
    x3 = jax.random.normal(k_x, (B3, C3, H3, W3), dtype=jnp.float32)
    ref3 = x3 + pos3
    out3 = jax.block_until_ready(
        positional_encoding_forward(
            x3, pos3, target_block_bytes=1 << 18, batch_block=2,
            min_bytes_for_pallas=0,
        )
    )
    assert jnp.allclose(out3, ref3, atol=1e-6), "mismatch vs reference (tiled)"

    # 4) Mixed dtype (bf16 activations + f32 parameter): promotes to f32 like torch.
    x4 = jax.random.normal(k_x, (B, C, H, W), dtype=jnp.bfloat16)
    ref4 = x4.astype(jnp.float32) + pos_embedding
    out4 = jax.block_until_ready(
        positional_encoding_forward(x4, pos_embedding, min_bytes_for_pallas=0)
    )
    assert out4.dtype == jnp.float32
    assert jnp.allclose(out4, ref4, atol=1e-6), "mismatch vs reference (bf16 -> f32)"

    print("KERNEL_OK")
</pallas_src>

<mosaic_0001>
module attributes {stable_mosaic.version = 11 : i64} {
  func.func @_add_pos_kernel(%arg0: i32, %arg1: i32, %arg2: memref<1x1x1024xf32, #tpu.memory_space<vmem>>, %arg3: memref<1x1x1024xf32, #tpu.memory_space<vmem>>, %arg4: memref<1x1x1024xf32, #tpu.memory_space<vmem>>) attributes {dimension_semantics = [#tpu.dimension_semantics<parallel>, #tpu.dimension_semantics<parallel>], iteration_bounds = array<i64: 1, 2>, scalar_prefetch = 0 : i64, scratch_operands = 0 : i64, tpu.core_type = #tpu.core_type<tc>, window_params = [{transform_indices = @transform_0, window_bounds = array<i64: 1, 1, 1024>}, {transform_indices = @transform_1, window_bounds = array<i64: 1, 1, 1024>}, {transform_indices = @transform_2, window_bounds = array<i64: 1, 1, 1024>}]} {
    %c0 = arith.constant 0 : index
    %c0_0 = arith.constant 0 : index
    %c0_1 = arith.constant 0 : index
    %0 = vector.load %arg2[%c0, %c0_0, %c0_1] : memref<1x1x1024xf32, #tpu.memory_space<vmem>>, vector<1x1x1024xf32>
    %c0_2 = arith.constant 0 : index
    %c0_3 = arith.constant 0 : index
    %c0_4 = arith.constant 0 : index
    %1 = vector.load %arg3[%c0_2, %c0_3, %c0_4] : memref<1x1x1024xf32, #tpu.memory_space<vmem>>, vector<1x1x1024xf32>
    %2 = arith.addf %0, %1 : vector<1x1x1024xf32>
    %c0_5 = arith.constant 0 : index
    %c0_6 = arith.constant 0 : index
    %c0_7 = arith.constant 0 : index
    %3 = vector.load %arg4[%c0_5, %c0_6, %c0_7] : memref<1x1x1024xf32, #tpu.memory_space<vmem>>, vector<1x1x1024xf32>
    tpu.vector_store %arg4[%c0_5, %c0_6, %c0_7], %2 {strides = array<i32>} : memref<1x1x1024xf32, #tpu.memory_space<vmem>>, vector<1x1x1024xf32>,
    return
  }
  func.func @transform_0(%arg0: i32, %arg1: i32) -> (i32, i32, i32) {
    %c0_i32 = arith.constant 0 : i32
    %c0_i32_0 = arith.constant 0 : i32
    return %arg1, %arg0, %c0_i32 : i32, i32, i32
  }
  func.func @transform_1(%arg0: i32, %arg1: i32) -> (i32, i32, i32) {
    %c0_i32 = arith.constant 0 : i32
    %c0_i32_0 = arith.constant 0 : i32
    %c0_i32_1 = arith.constant 0 : i32
    return %c0_i32, %arg0, %c0_i32_0 : i32, i32, i32
  }
  func.func @transform_2(%arg0: i32, %arg1: i32) -> (i32, i32, i32) {
    %c0_i32 = arith.constant 0 : i32
    %c0_i32_0 = arith.constant 0 : i32
    return %arg1, %arg0, %c0_i32 : i32, i32, i32
  }
}

</mosaic_0001>

<llo_original>
// kernel: tpu_custom_call.1
$region0: #{tpu_custom_call.1}
  #allocation0 [shape = 'u32[]', space=smem, size = 0x4, offset = 0x4, fixed_abs, tag = 'smem constant byte address 0x4 - core index']
  #allocation1 [shape = 'u32[72,128]{1,0:T(1,128)}', space=vmem, size = 0x9000, scoped, tag = 'internal scratch']
  %s0 = inlined_call_operand.hbm [shape: f32[2,1,1024], index: 0, kind: input, shape index: {}, may-alias: {0,2}]
  %s1 = inlined_call_operand.vmem [shape: f32[1,1,1024], index: 1, kind: input, shape index: {}]
  %s2 = inlined_call_operand.hbm [shape: f32[2,1,1024], index: 2, kind: output, shape index: {}, may-alias: {0,2}]
  %s3 = sld [smem:[#allocation0]]
  $region45: #{tpu_custom_call.1} parent=0
    _
  %s5 = ssub.s32 1, %s3
  %s6 = scalar_select 0, %s5, %s3
  $region1: #{tpu_custom_call.1} parent=0
    #allocation2 [shape = 'u8[8192]{0}', space=vmem, size = 0x2000, scoped, tag = 'input window, operand 0']
    #allocation3 [shape = 's32[2]{0}', space=sflag, size = 0x8, scoped, tag = 'scoped memory for tpu_custom_call.1']
    #allocation4 [shape = 's32[2]{0}', space=sflag, size = 0x8, scoped, tag = 'scoped memory for tpu_custom_call.1']
    #allocation5 [shape = 'u8[8192]{0}', space=vmem, size = 0x2000, scoped, tag = 'output window, operand 0']
    %7 = vsyncpa [#allocation3], 0
    %s8 = scalar_lea.sflag [#allocation3], 1
    %9 = vsyncpa %s8, 0
    %10 = vsyncpa [#allocation4], 0
    %s11 = scalar_lea.sflag [#allocation4], 1
    %12 = vsyncpa %s11, 0
    loop: start=0, step=1, limit=4
    $region2: #{tpu_custom_call.1} parent=1 // loop_pre_header
      _
    $region3: #{tpu_custom_call.1} parent=1 // loop_header
      %s14 = sphi 0, %s18
      %p15 = scmp.ge.s32.totalorder %s14, 4
      %s21 = sphi 0, %s33
      %s22 = sphi 0, %s29
      %s23 = sphi 0, %s21
      %s24 = sphi 0, %s22
      %s25 = sphi 0, %s23
      %s26 = sphi 0, %s24
      %s38 = sphi 0, %s40
      %s41 = sphi 0, %s38
      %s42 = sphi 0, %s41
      %s58 = sphi 0, %s42
      %s64 = sphi 0, %s66
      %s67 = sphi 0, %s64
      %s68 = sphi 0, %s67
      %s84 = sphi 0, %s68
      %s92 = sphi 0, %s94
      %s95 = sphi 0, %s92
      %s96 = sphi 0, %s95
      %s112 = sphi 0, %s96
    $region4: #{tpu_custom_call.1} parent=1 // loop_header_branch
      %17 = sbr.rel (%p15) target = $region8
    $region5: #{tpu_custom_call.1} parent=1 // loop_body
      %s19 = ssub.s32 %s14, 1
      %s20 = ssub.s32 %s14, 2
      %s27 = sadd.s32 1, %s22
      %p28 = scmp.ge.s32.totalorder %s27, 2
      %s29 = scalar_select %p28, 0, %s27
      %s30 = sadd.s32 1, %s21
      %s31 = scalar_select %p28, %s30, %s21
      %p32 = scmp.ge.s32.totalorder %s31, 1
      %s33 = scalar_select %p32, 0, %s31
      %s34 = ssub.s32 %s22, %s29
      %s35 = ssub.s32 %s21, %s33
      %s36 = sor.u32 %s34, %s35
      %p37 = scmp.eq.s32.totalorder %s36, 0
      %s39 = sadd.s32 %s38, 1
      %s40 = scalar_select %p37, %s38, %s39
      %p43 = pneg %p37
      %p44 = scmp.eq.s32.totalorder %s14, 1
      %p45 = por %p43, %p44
      %p46 = scmp.ne.s32.totalorder %s38, %s41
      %p47 = scmp.eq.s32.totalorder %s14, 0
      %p48 = por %p46, %p47
      %p49 = scmp.ne.s32.totalorder %s38, %s41
      %p50 = scmp.eq.s32.totalorder %s19, 1
      %p51 = por %p49, %p50
      %p52 = scmp.ne.s32.totalorder %s41, %s42
      %p53 = scmp.eq.s32.totalorder %s19, 0
      %p54 = por %p52, %p53
      %p55 = scmp.ne.s32.totalorder %s41, %s42
      %p56 = scmp.eq.s32.totalorder %s20, 1
      %p57 = por %p55, %p56
      %p59 = scmp.ne.s32.totalorder %s42, %s58
      %p60 = scmp.eq.s32.totalorder %s20, 0
      %p61 = por %p59, %p60
      %s62 = ssub.s32 %s21, %s33
      %p63 = scmp.eq.s32.totalorder %s62, 0
      %s65 = sadd.s32 %s64, 1
      %s66 = scalar_select %p63, %s64, %s65
      %p69 = pneg %p63
      %p70 = scmp.eq.s32.totalorder %s14, 1
      %p71 = por %p69, %p70
      %p72 = scmp.ne.s32.totalorder %s64, %s67
      %p73 = scmp.eq.s32.totalorder %s14, 0
      %p74 = por %p72, %p73
      %p75 = scmp.ne.s32.totalorder %s64, %s67
      %p76 = scmp.eq.s32.totalorder %s19, 1
      %p77 = por %p75, %p76
      %p78 = scmp.ne.s32.totalorder %s67, %s68
      %p79 = scmp.eq.s32.totalorder %s19, 0
      %p80 = por %p78, %p79
      %p81 = scmp.ne.s32.totalorder %s67, %s68
      %p82 = scmp.eq.s32.totalorder %s20, 1
      %p83 = por %p81, %p82
      %p85 = scmp.ne.s32.totalorder %s68, %s84
      %p86 = scmp.eq.s32.totalorder %s20, 0
      %p87 = por %p85, %p86
      %s88 = ssub.s32 %s22, %s29
      %s89 = ssub.s32 %s21, %s33
      %s90 = sor.u32 %s88, %s89
      %p91 = scmp.eq.s32.totalorder %s90, 0
      %s93 = sadd.s32 %s92, 1
      %s94 = scalar_select %p91, %s92, %s93
      %p97 = pneg %p91
      %p98 = scmp.eq.s32.totalorder %s14, 1
      %p99 = por %p97, %p98
      %p100 = scmp.ne.s32.totalorder %s92, %s95
      %p101 = scmp.eq.s32.totalorder %s14, 0
      %p102 = por %p100, %p101
      %p103 = scmp.ne.s32.totalorder %s92, %s95
      %p104 = scmp.eq.s32.totalorder %s19, 1
      %p105 = por %p103, %p104
      %p106 = scmp.ne.s32.totalorder %s95, %s96
      %p107 = scmp.eq.s32.totalorder %s19, 0
      %p108 = por %p106, %p107
      %p109 = scmp.ne.s32.totalorder %s95, %s96
      %p110 = scmp.eq.s32.totalorder %s20, 1
      %p111 = por %p109, %p110
      %p113 = scmp.ne.s32.totalorder %s96, %s112
      %p114 = scmp.eq.s32.totalorder %s20, 0
      %p115 = por %p113, %p114
      %p116 = scmp.le.s32.totalorder 1, %s14
      %p117 = scmp.lt.s32.totalorder %s14, 3
      %p118 = pnand %p116, %p117
      %p119 = pneg %p118
      // Predicated region
      $region9: #{tpu_custom_call.1} parent=5 // pred_check
        _
      $region10: #{tpu_custom_call.1} parent=5 // pred_check_branch
        %121 = sbr.rel (%p118) target = $region12
      $region11: #{tpu_custom_call.1} parent=5 // pred_region
        %s122 = ssub.s32 %s14, 1
        // Predicated region
        $region13: #{tpu_custom_call.1} parent=11 // pred_check
          %p123 = pneg %p80
        $region14: #{tpu_custom_call.1} parent=11 // pred_check_branch
          %125 = sbr.rel (%p123) target = $region16
        $region15: #{tpu_custom_call.1} parent=11 // pred_region
          %p126 = scmp.lt.s32.totalorder %s23, 0
          %s127 = scalar_select %p126, %s23, 0
          %s128 = smul.addr %s127, 8
          %s129 = scalar_lea.vmem %s1, %s128
        $region16: #{tpu_custom_call.1} parent=11 // pred_fallthru
          _
      $region12: #{tpu_custom_call.1} parent=5 // pred_fallthru
        _
      %p130 = scmp.lt.s32.totalorder %s14, 2
      // Predicated region
      $region17: #{tpu_custom_call.1} parent=5 // pred_check
        %p131 = pneg %p130
      $region18: #{tpu_custom_call.1} parent=5 // pred_check_branch
        %133 = sbr.rel (%p131) target = $region20
      $region19: #{tpu_custom_call.1} parent=5 // pred_region
        // Predicated region
        $region21: #{tpu_custom_call.1} parent=19 // pred_check
          %p134 = pneg %p48
        $region22: #{tpu_custom_call.1} parent=19 // pred_check_branch
          %136 = sbr.rel (%p134) target = $region24
        $region23: #{tpu_custom_call.1} parent=19 // pred_region
          %s137 = sand.u32 %s38, 1
          %s138 = scalar_lea.sflag [#allocation3], %s137
          %s139 = sand.u32 %s38, 1
          %s140 = smul.addr %s139, 8
          %s141 = scalar_lea.vmem [#allocation2], %s140
          %143 = vsyncadd %s138, 0
          %s144 = smul.addr %s21, 8
          %s145 = smul.addr %s22, 8
          %s146 = sadd.s32 %s144, %s145
          %s147 = scalar_lea.hbm %s0, %s146
          %s149 = sshll.u32 %s147, 4
          %s150 = int_to_ptr.hbm [resolvable:$true] %s149
          %s151 = sshll.u32 %s141, 4
          %s152 = int_to_ptr.vmem [resolvable:$true] %s151
          %154 = dma.hbm_to_vmem [thread:$0]  %s150, 128, %s152, %s138
        $region24: #{tpu_custom_call.1} parent=19 // pred_fallthru
          _
      $region20: #{tpu_custom_call.1} parent=5 // pred_fallthru
        _
      %p155 = scmp.le.s32.totalorder 1, %s14
      %p156 = scmp.lt.s32.totalorder %s14, 3
      %p157 = pnand %p155, %p156
      %p158 = pneg %p157
      // Predicated region
      $region25: #{tpu_custom_call.1} parent=5 // pred_check
        _
      $region26: #{tpu_custom_call.1} parent=5 // pred_check_branch
        %160 = sbr.rel (%p157) target = $region28
      $region27: #{tpu_custom_call.1} parent=5 // pred_region
        %s161 = ssub.s32 %s14, 1
        %s162 = sand.u32 %s41, 1
        %s163 = scalar_lea.sflag [#allocation3], %s162
        %s164 = sand.u32 %s41, 1
        %s165 = smul.addr %s164, 8
        %s166 = scalar_lea.vmem [#allocation2], %s165
        // Predicated region
        $region29: #{tpu_custom_call.1} parent=27 // pred_check
          %p167 = pneg %p54
        $region30: #{tpu_custom_call.1} parent=27 // pred_check_branch
          %169 = sbr.rel (%p167) target = $region32
        $region31: #{tpu_custom_call.1} parent=27 // pred_region
          %171 = dma.done %s163, 128
        $region32: #{tpu_custom_call.1} parent=27 // pred_fallthru
          _
        %s172 = sand.u32 %s41, 1
        %s173 = scalar_lea.sflag [#allocation3], %s172
        %s174 = sand.u32 %s41, 1
        %s175 = smul.addr %s174, 8
        %s176 = scalar_lea.vmem [#allocation2], %s175
        %p177 = pneg %p54
        %p178 = pneg %p51
        %p179 = scmp.lt.s32.totalorder %s23, 0
        %s180 = scalar_select %p179, %s23, 0
        %s181 = smul.addr %s180, 8
        %s182 = scalar_lea.vmem %s1, %s181
        %p183 = pneg %p80
        %p184 = pneg %p77
        %p185 = pneg %p108
        %p186 = pneg %p105
        %s187 = sand.u32 %s95, 1
        %s188 = scalar_lea.sflag [#allocation4], %s187
        %s189 = sand.u32 %s95, 1
        %s190 = smul.addr %s189, 8
        %s191 = scalar_lea.vmem [#allocation5], %s190
        %p192 = scmp.lt.s32.totalorder %s23, 0
        %s193 = scalar_select %p192, %s23, 0
        %s194 = smul.addr %s193, 8
        %s195 = scalar_lea.vmem %s1, %s194
        %v196 = vld [vmem:[%s166] sm:$0xff]
        %v197 = vld [vmem:[%s195] sm:$0xff]
        %v198 = vadd.f32 %v196, %v197
        %199 = vst [vmem:[%s191] sm:$0xff] %v198
        %s200 = sand.u32 %s95, 1
        %s201 = scalar_lea.sflag [#allocation4], %s200
        %s202 = sand.u32 %s95, 1
        %s203 = smul.addr %s202, 8
        %s204 = scalar_lea.vmem [#allocation5], %s203
        // Predicated region
        $region33: #{tpu_custom_call.1} parent=27 // pred_check
          %p205 = pneg %p105
        $region34: #{tpu_custom_call.1} parent=27 // pred_check_branch
          %207 = sbr.rel (%p205) target = $region36
        $region35: #{tpu_custom_call.1} parent=27 // pred_region
          %209 = vsyncadd %s201, 0
          %s210 = smul.addr %s23, 8
          %s211 = smul.addr %s24, 8
          %s212 = sadd.s32 %s210, %s211
          %s213 = scalar_lea.hbm %s2, %s212
          %s215 = sshll.u32 %s204, 4
          %s216 = int_to_ptr.vmem [resolvable:$true] %s215
          %s217 = sshll.u32 %s213, 4
          %s218 = int_to_ptr.hbm [resolvable:$true] %s217
          %220 = dma.vmem_to_hbm [thread:$0]  %s216, 128, %s218, %s201
        $region36: #{tpu_custom_call.1} parent=27 // pred_fallthru
          _
      $region28: #{tpu_custom_call.1} parent=5 // pred_fallthru
        _
      %p221 = scmp.le.s32.totalorder 2, %s14
      // Predicated region
      $region37: #{tpu_custom_call.1} parent=5 // pred_check
        %p222 = pneg %p221
      $region38: #{tpu_custom_call.1} parent=5 // pred_check_branch
        %224 = sbr.rel (%p222) target = $region40
      $region39: #{tpu_custom_call.1} parent=5 // pred_region
        %s225 = ssub.s32 %s14, 2
        // Predicated region
        $region41: #{tpu_custom_call.1} parent=39 // pred_check
          %p226 = pneg %p111
        $region42: #{tpu_custom_call.1} parent=39 // pred_check_branch
          %228 = sbr.rel (%p226) target = $region44
        $region43: #{tpu_custom_call.1} parent=39 // pred_region
          %s229 = sand.u32 %s96, 1
          %s230 = scalar_lea.sflag [#allocation4], %s229
          %s231 = sand.u32 %s96, 1
          %s232 = smul.addr %s231, 8
          %s233 = scalar_lea.vmem [#allocation5], %s232
          %235 = dma.done %s230, 128
        $region44: #{tpu_custom_call.1} parent=39 // pred_fallthru
          _
      $region40: #{tpu_custom_call.1} parent=5 // pred_fallthru
        _
    $region6: #{tpu_custom_call.1} parent=1 // loop_footer
      %s18 = sadd.s32 1, %s14
    $region7: #{tpu_custom_call.1} parent=1 // loop_footer_branch
      %13 = sbr.rel target = $region3
    $region8: #{tpu_custom_call.1} parent=1 // loop_exit
      _
    %236 = vsyncpa [#allocation3], 1
    %s237 = scalar_lea.sflag [#allocation3], 1
    %238 = vsyncpa %s237, 1
    %239 = vsyncpa [#allocation4], 1
    %s240 = scalar_lea.sflag [#allocation4], 1
    %241 = vsyncpa %s240, 1

</llo_original>
